<compile_context>
chip_gen: v7x
topology: tpu7x:2x2x1
jax: 0.10.0
libtpu: 0.0.40
codegen_flags: <defaults>
</compile_context>

<pallas_src>
import math
import numpy as np
import jax
import jax.numpy as jnp
from jax import lax
from jax.experimental import pallas as pl
from jax.experimental.pallas import tpu as pltpu

_HALO_ROWS = 8  # halo blocks are 8 rows so every BlockSpec stays (8,128)-aligned


def _round_up(x, m):
    return ((x + m - 1) // m) * m


def choose_packing(C, target_lanes=128):
    """Pick (G, C_pad): G consecutive positions x C_pad channels per packed row.

    Guarantees L = G * C_pad is a multiple of 128 (pads channels if needed),
    so stores are always full-width unmasked vregs.
    """
    if C >= target_lanes:
        return 1, _round_up(C, target_lanes)
    c_pad = 1 << (C - 1).bit_length()        # next power of two -> divides 128
    return target_lanes // c_pad, c_pad


def prepare_params(conv_w, conv_b, lo_w, lo_b, *, group, c_pad,
                   matmul_dtype=jnp.bfloat16):
    """One-time weight packing for the (R, L = G*C_pad) layout (off hot path).

    conv_w: (C, C, 3) PyTorch Conv1d weight     conv_b: (C,)
    lo_w  : (C, C)    PyTorch Linear weight     lo_b  : (C,)
    """
    C = conv_b.shape[0]
    G, Cp = group, c_pad
    L = G * Cp

    def embed(blk):                      # (C, C) -> (Cp, Cp) with zero channel pad
        return jnp.zeros((Cp, Cp), jnp.float32).at[:C, :C].set(blk)

    # Conv taps in x @ W form: tap t multiplies x[n + t - 1].
    A = embed(conv_w[:, :, 0].T)         # applied to x[n-1]
    Bm = embed(conv_w[:, :, 1].T)        # applied to x[n]
    Cc = embed(conv_w[:, :, 2].T)        # applied to x[n+1]
    Wl = embed(lo_w.T)

    def blockify(placements):
        w = jnp.zeros((L, L), jnp.float32)
        for src, dst, blk in placements:
            w = w.at[src * Cp:(src + 1) * Cp, dst * Cp:(dst + 1) * Cp].set(blk)
        return w

    band = []
    for q in range(G):
        band.append((q, q, Bm))
        if q + 1 < G:
            band.append((q, q + 1, A))       # position q is position (q+1)'s "n-1"
            band.append((q + 1, q, Cc))      # position q+1 is position q's "n+1"
    w_band = blockify(band)                                       # (L, L) in-row band
    w_lin = blockify([(q, q, Wl) for q in range(G)])              # (L, L) block-diag

    # Slim halo weights: only Cp source lanes cross a packed-row boundary.
    a_halo = jnp.zeros((Cp, L), jnp.float32).at[:, 0:Cp].set(A)            # prev-row tail
    c_halo = jnp.zeros((Cp, L), jnp.float32).at[:, (G - 1) * Cp:L].set(Cc)  # next-row head

    b_conv = jnp.tile(jnp.pad(conv_b, (0, Cp - C)), G).reshape(1, L).astype(jnp.float32)
    b_lin = jnp.tile(jnp.pad(lo_b, (0, Cp - C)), G).reshape(1, L).astype(jnp.float32)

    return (w_band.astype(matmul_dtype), a_halo.astype(matmul_dtype),
            c_halo.astype(matmul_dtype), b_conv,
            w_lin.astype(matmul_dtype), b_lin)


def sparse_kernel1d_kernel(x_ref, xprev_ref, xnext_ref,
                           wband_ref, ahalo_ref, chalo_ref, bconv_ref,
                           wlin_ref, blin_ref, o_ref):
    # x_ref    : (TR, L)  current row tile (bf16)
    # xprev_ref: (8, L)   halo block containing row t*TR - 1 (its last row)
    # xnext_ref: (8, L)   halo block containing row (t+1)*TR (its first row)
    # wband_ref: (L, L)   banded in-row conv weight (bf16)
    # ahalo_ref: (Cp, L)  slim prev-row conv weight (bf16)
    # chalo_ref: (Cp, L)  slim next-row conv weight (bf16)
    # bconv_ref: (1, L)   packed conv bias (f32)
    # wlin_ref : (L, L)   block-diagonal linear weight (bf16)
    # blin_ref : (1, L)   packed linear bias (f32)
    # o_ref    : (TR, L)  output tile (f32)
    TR, L = x_ref.shape
    Cp = ahalo_ref.shape[0]
    t = pl.program_id(1)
    nt = pl.num_programs(1)

    xp = x_ref[...]                                              # (TR, L) bf16

    # Halo rows from neighbouring tiles; zeroed at the sequence ends so they
    # reproduce Conv1d's zero padding (the clamped index_map reads are valid
    # but discarded there).
    prev_row = xprev_ref[_HALO_ROWS - 1:_HALO_ROWS, :]           # (1, L)
    next_row = xnext_ref[0:1, :]                                 # (1, L)
    prev_row = jnp.where(t > 0, prev_row, jnp.zeros_like(prev_row))
    next_row = jnp.where(t < nt - 1, next_row, jnp.zeros_like(next_row))

    # Shift-by-one-packed-row operands, kept slim: only the Cp lanes that feed
    # a neighbouring sequence position ever cross a row boundary.
    prev_tail = jnp.concatenate(
        [prev_row[:, L - Cp:], xp[:TR - 1, L - Cp:]], axis=0)    # (TR, Cp)
    next_head = jnp.concatenate(
        [xp[1:, :Cp], next_row[:, :Cp]], axis=0)                 # (TR, Cp)

    # Conv1d(k=3, pad=1) as three accumulated MXU matmuls (no im2col slab):
    # dense in-row band + two slim halo corrections, f32 accumulation.
    acc = jnp.dot(xp, wband_ref[...], preferred_element_type=jnp.float32)
    acc = acc + jnp.dot(prev_tail, ahalo_ref[...],
                        preferred_element_type=jnp.float32)
    acc = acc + jnp.dot(next_head, chalo_ref[...],
                        preferred_element_type=jnp.float32)
    acc = acc + bconv_ref[...]

    # Exact (erf) GELU, matching nn.GELU() default.
    h = 0.5 * acc * (1.0 + lax.erf(acc * 0.7071067811865476))

    # Linear(C, C) as a block-diagonal (L, L) matmul on the packed layout.
    out = jnp.dot(h.astype(wlin_ref.dtype), wlin_ref[...],
                  preferred_element_type=jnp.float32) + blin_ref[...]
    o_ref[...] = out.astype(o_ref.dtype)


def sparse_kernel1d_forward(x, params, *, group, c_pad, tile_rows=1024):
    """x: (B, N, c, ich) float32; params from prepare_params()."""
    w_band, a_halo, c_halo, b_conv, w_lin, b_lin = params
    B, N, c, ich = x.shape
    C = c * ich
    G, Cp = group, c_pad
    L = G * Cp

    xr = x.reshape(B, N, C)
    if Cp != C:                                    # pad channels so L % 128 == 0
        xr = jnp.pad(xr, ((0, 0), (0, 0), (0, Cp - C)))

    # Pack G positions per 128-lane row and pad N so the packed row count R is
    # a multiple of the row tile TR.  Zero rows behave exactly like Conv1d's
    # zero padding and are trimmed afterwards.
    r_raw = pl.cdiv(N, G)
    TR = min(tile_rows, _round_up(r_raw, _HALO_ROWS))
    TR = _round_up(TR, _HALO_ROWS)
    R = _round_up(r_raw, TR)
    n_pad = R * G
    if n_pad != N:
        xr = jnp.pad(xr, ((0, 0), (0, n_pad - N), (0, 0)))

    # bf16 input halves HBM read traffic; MXU operands are bf16 either way
    # (f32 accumulation), so accuracy is unchanged.  Output stays f32.
    xr = xr.reshape(B, R, L).astype(jnp.bfloat16)

    n_tiles = R // TR
    trb = TR // _HALO_ROWS        # row tile measured in 8-row halo blocks
    rb = R // _HALO_ROWS

    out = pl.pallas_call(
        sparse_kernel1d_kernel,
        out_shape=jax.ShapeDtypeStruct((B, R, L), jnp.float32),
        grid=(B, n_tiles),
        in_specs=[
            # current row tile
            pl.BlockSpec((None, TR, L), lambda b, t: (b, t, 0)),
            # 8-row halo blocks holding row t*TR-1 / row (t+1)*TR (clamped at
            # the sequence ends; the kernel zeroes them there)
            pl.BlockSpec((None, _HALO_ROWS, L),
                         lambda b, t: (b, jnp.maximum(t * trb - 1, 0), 0)),
            pl.BlockSpec((None, _HALO_ROWS, L),
                         lambda b, t: (b, jnp.minimum((t + 1) * trb, rb - 1), 0)),
            pl.BlockSpec((L, L), lambda b, t: (0, 0)),     # banded conv weight
            pl.BlockSpec((Cp, L), lambda b, t: (0, 0)),    # prev-row halo weight
            pl.BlockSpec((Cp, L), lambda b, t: (0, 0)),    # next-row halo weight
            pl.BlockSpec((1, L), lambda b, t: (0, 0)),     # conv bias
            pl.BlockSpec((L, L), lambda b, t: (0, 0)),     # block-diag linear weight
            pl.BlockSpec((1, L), lambda b, t: (0, 0)),     # linear bias
        ],
        out_specs=pl.BlockSpec((None, TR, L), lambda b, t: (b, t, 0)),
        compiler_params=pltpu.CompilerParams(
            # Both grid axes are independent -> sharded across v7x's 2 TCs even
            # when B <= 2; harmless on single-TC v5e/v6e.
            dimension_semantics=("parallel", "parallel")),
        # TODO(synk): add pipeline_mode=pl.Buffered(3) on the x spec if traces
        # show exposed DMA at small C; tiles are sized to fit the 32 MiB
        # default scoped-VMEM limit on v5e/v6e/v7x so no vmem_limit override.
    )(xr, xr, xr, w_band, a_halo, c_halo, b_conv, w_lin, b_lin)

    out = out.reshape(B, n_pad, Cp)[:, :N, :C]
    return out.reshape(B, N, c, ich)


def _reference(x, conv_w, conv_b, lo_w, lo_b):
    """Pure-JAX f32 reference mirroring the PyTorch forward."""
    B, N, c, ich = x.shape
    C = c * ich
    xr = x.reshape(B, N, C)
    xp = jnp.pad(xr, ((0, 0), (1, 1), (0, 0)))
    wc = jnp.transpose(conv_w, (2, 1, 0))  # (3, C_in, C_out)
    acc = (xp[:, 0:N, :] @ wc[0] + xp[:, 1:N + 1, :] @ wc[1]
           + xp[:, 2:N + 2, :] @ wc[2]) + conv_b
    h = 0.5 * acc * (1.0 + lax.erf(acc / jnp.sqrt(2.0).astype(acc.dtype)))
    out = h @ lo_w.T + lo_b
    return out.reshape(B, N, c, ich)


def _run_case(B, N, c, k, tile_rows):
    C = c * k
    key = jax.random.PRNGKey(0)
    kx, kcw, kcb, klw, klb = jax.random.split(key, 5)

    x = jax.random.normal(kx, (B, N, c, k), dtype=jnp.float32)

    # Deterministic parameter init (uniform fan-in, like PyTorch defaults).
    conv_bound = 1.0 / math.sqrt(C * 3)
    conv_w = jax.random.uniform(kcw, (C, C, 3), jnp.float32, -conv_bound, conv_bound)
    conv_b = jax.random.uniform(kcb, (C,), jnp.float32, -conv_bound, conv_bound)
    lin_bound = 1.0 / math.sqrt(C)
    lo_w = jax.random.uniform(klw, (C, C), jnp.float32, -lin_bound, lin_bound)
    lo_b = jax.random.uniform(klb, (C,), jnp.float32, -lin_bound, lin_bound)

    G, Cp = choose_packing(C)
    params = prepare_params(conv_w, conv_b, lo_w, lo_b, group=G, c_pad=Cp)

    fwd = jax.jit(sparse_kernel1d_forward,
                  static_argnames=("group", "c_pad", "tile_rows"))
    out = fwd(x, params, group=G, c_pad=Cp, tile_rows=tile_rows)
    out = jax.block_until_ready(out)

    ref = _reference(x, conv_w, conv_b, lo_w, lo_b)
    # Tolerance sized for bf16 MXU operands with f32 accumulation.
    np.testing.assert_allclose(np.asarray(out), np.asarray(ref),
                               rtol=2e-2, atol=1e-2)


if __name__ == "__main__":
    # Main module config: k=8, c=4 -> C = 32 channels, G = 4 positions packed
    # into each 128-lane row (single row tile).
    _run_case(B=2, N=16, c=4, k=8, tile_rows=1024)
    # Multi-tile path: several row tiles per batch exercises the cross-tile
    # conv halo and N padding (N not divisible by G*TR).
    _run_case(B=2, N=100, c=4, k=8, tile_rows=8)
    # Channel-padding path: C = 24 does not divide 128 -> padded to C_pad = 32.
    _run_case(B=1, N=40, c=3, k=8, tile_rows=8)

    print("KERNEL_OK")
</pallas_src>

<mosaic_0001>
module attributes {stable_mosaic.version = 11 : i64} {
  func.func @sparse_kernel1d_kernel(%arg0: i32, %arg1: i32, %arg2: memref<1x8x128xbf16, #tpu.memory_space<vmem>>, %arg3: memref<1x8x128xbf16, #tpu.memory_space<vmem>>, %arg4: memref<1x8x128xbf16, #tpu.memory_space<vmem>>, %arg5: memref<128x128xbf16, #tpu.memory_space<vmem>>, %arg6: memref<32x128xbf16, #tpu.memory_space<vmem>>, %arg7: memref<32x128xbf16, #tpu.memory_space<vmem>>, %arg8: memref<1x128xf32, #tpu.memory_space<vmem>>, %arg9: memref<128x128xbf16, #tpu.memory_space<vmem>>, %arg10: memref<1x128xf32, #tpu.memory_space<vmem>>, %arg11: memref<1x8x128xf32, #tpu.memory_space<vmem>>) attributes {dimension_semantics = [#tpu.dimension_semantics<parallel>, #tpu.dimension_semantics<parallel>], iteration_bounds = array<i64: 2, 1>, scalar_prefetch = 0 : i64, scratch_operands = 0 : i64, tpu.core_type = #tpu.core_type<tc>, window_params = [{transform_indices = @transform_0, window_bounds = array<i64: 1, 8, 128>}, {transform_indices = @transform_1, window_bounds = array<i64: 1, 8, 128>}, {transform_indices = @transform_2, window_bounds = array<i64: 1, 8, 128>}, {pipeline_mode = #tpu.pipeline_mode<synchronous>, transform_indices = @transform_3, window_bounds = array<i64: 128, 128>}, {pipeline_mode = #tpu.pipeline_mode<synchronous>, transform_indices = @transform_4, window_bounds = array<i64: 32, 128>}, {pipeline_mode = #tpu.pipeline_mode<synchronous>, transform_indices = @transform_5, window_bounds = array<i64: 32, 128>}, {pipeline_mode = #tpu.pipeline_mode<synchronous>, transform_indices = @transform_6, window_bounds = array<i64: 1, 128>}, {pipeline_mode = #tpu.pipeline_mode<synchronous>, transform_indices = @transform_7, window_bounds = array<i64: 128, 128>}, {pipeline_mode = #tpu.pipeline_mode<synchronous>, transform_indices = @transform_8, window_bounds = array<i64: 1, 128>}, {transform_indices = @transform_9, window_bounds = array<i64: 1, 8, 128>}]} {
    %c0 = arith.constant 0 : index
    %c0_0 = arith.constant 0 : index
    %c0_1 = arith.constant 0 : index
    %0 = vector.load %arg2[%c0, %c0_0, %c0_1] : memref<1x8x128xbf16, #tpu.memory_space<vmem>>, vector<1x8x128xbf16>
    %1 = vector.shape_cast %0 : vector<1x8x128xbf16> to vector<8x128xbf16>
    %c0_2 = arith.constant 0 : index
    %c7 = arith.constant 7 : index
    %c0_3 = arith.constant 0 : index
    %2 = vector.load %arg3[%c0_2, %c7, %c0_3] : memref<1x8x128xbf16, #tpu.memory_space<vmem>>, vector<1x1x128xbf16>
    %3 = vector.shape_cast %2 : vector<1x1x128xbf16> to vector<1x128xbf16>
    %c0_4 = arith.constant 0 : index
    %c0_5 = arith.constant 0 : index
    %c0_6 = arith.constant 0 : index
    %4 = vector.load %arg4[%c0_4, %c0_5, %c0_6] : memref<1x8x128xbf16, #tpu.memory_space<vmem>>, vector<1x1x128xbf16>
    %5 = vector.shape_cast %4 : vector<1x1x128xbf16> to vector<1x128xbf16>
    %c0_i32 = arith.constant 0 : i32
    %6 = arith.cmpi sgt, %arg1, %c0_i32 : i32
    %cst = arith.constant 0.000000e+00 : bf16
    %7 = vector.broadcast %cst : bf16 to vector<1x128xbf16>
    %8 = arith.select %6, %3, %7 : vector<1x128xbf16>
    %c0_i32_7 = arith.constant 0 : i32
    %9 = arith.cmpi slt, %arg1, %c0_i32_7 : i32
    %cst_8 = arith.constant 0.000000e+00 : bf16
    %10 = vector.broadcast %cst_8 : bf16 to vector<1x128xbf16>
    %11 = arith.select %9, %5, %10 : vector<1x128xbf16>
    %12 = vector.extract_strided_slice %8 {offsets = [0, 96], sizes = [1, 32], strides = [1, 1]} : vector<1x128xbf16> to vector<1x32xbf16>
    %13 = vector.extract_strided_slice %1 {offsets = [0, 96], sizes = [7, 32], strides = [1, 1]} : vector<8x128xbf16> to vector<7x32xbf16>
    %14 = tpu.concatenate %12, %13 in 0 : vector<1x32xbf16>, vector<7x32xbf16> -> vector<8x32xbf16>
    %15 = vector.extract_strided_slice %1 {offsets = [1, 0], sizes = [7, 32], strides = [1, 1]} : vector<8x128xbf16> to vector<7x32xbf16>
    %16 = vector.extract_strided_slice %11 {offsets = [0, 0], sizes = [1, 32], strides = [1, 1]} : vector<1x128xbf16> to vector<1x32xbf16>
    %17 = tpu.concatenate %15, %16 in 0 : vector<7x32xbf16>, vector<1x32xbf16> -> vector<8x32xbf16>
    %c0_9 = arith.constant 0 : index
    %c0_10 = arith.constant 0 : index
    %18 = vector.load %arg5[%c0_9, %c0_10] : memref<128x128xbf16, #tpu.memory_space<vmem>>, vector<128x128xbf16>
    %cst_11 = arith.constant dense<0.000000e+00> : vector<8x128xf32>
    %19 = tpu.matmul %1, %18, %cst_11 {dimension_numbers = #tpu.dot_dimension_numbers<[1], [0], [0], [1], [0, 0, 1, 1], [], []>} : vector<8x128xbf16>, vector<128x128xbf16>, vector<8x128xf32> -> vector<8x128xf32>
    %c0_12 = arith.constant 0 : index
    %c0_13 = arith.constant 0 : index
    %20 = vector.load %arg6[%c0_12, %c0_13] : memref<32x128xbf16, #tpu.memory_space<vmem>>, vector<32x128xbf16>
    %cst_14 = arith.constant dense<0.000000e+00> : vector<8x128xf32>
    %21 = tpu.matmul %14, %20, %cst_14 {dimension_numbers = #tpu.dot_dimension_numbers<[1], [0], [0], [1], [0, 0, 1, 1], [], []>} : vector<8x32xbf16>, vector<32x128xbf16>, vector<8x128xf32> -> vector<8x128xf32>
    %22 = arith.addf %19, %21 : vector<8x128xf32>
    %c0_15 = arith.constant 0 : index
    %c0_16 = arith.constant 0 : index
    %23 = vector.load %arg7[%c0_15, %c0_16] : memref<32x128xbf16, #tpu.memory_space<vmem>>, vector<32x128xbf16>
    %cst_17 = arith.constant dense<0.000000e+00> : vector<8x128xf32>
    %24 = tpu.matmul %17, %23, %cst_17 {dimension_numbers = #tpu.dot_dimension_numbers<[1], [0], [0], [1], [0, 0, 1, 1], [], []>} : vector<8x32xbf16>, vector<32x128xbf16>, vector<8x128xf32> -> vector<8x128xf32>
    %25 = arith.addf %22, %24 : vector<8x128xf32>
    %c0_18 = arith.constant 0 : index
    %c0_19 = arith.constant 0 : index
    %26 = vector.load %arg8[%c0_18, %c0_19] : memref<1x128xf32, #tpu.memory_space<vmem>>, vector<1x128xf32>
    %27 = vector.broadcast %26 : vector<1x128xf32> to vector<8x128xf32>
    %28 = arith.addf %25, %27 : vector<8x128xf32>
    %cst_20 = arith.constant 5.000000e-01 : f32
    %29 = vector.broadcast %cst_20 : f32 to vector<8x128xf32>
    %30 = arith.mulf %29, %28 : vector<8x128xf32>
    %cst_21 = arith.constant 0.707106769 : f32
    %31 = vector.broadcast %cst_21 : f32 to vector<8x128xf32>
    %32 = arith.mulf %28, %31 : vector<8x128xf32>
    %33 = math.erf %32 : vector<8x128xf32>
    %cst_22 = arith.constant 1.000000e+00 : f32
    %34 = vector.broadcast %cst_22 : f32 to vector<8x128xf32>
    %35 = arith.addf %34, %33 : vector<8x128xf32>
    %36 = arith.mulf %30, %35 : vector<8x128xf32>
    %37 = arith.truncf %36 : vector<8x128xf32> to vector<8x128xbf16>
    %c0_23 = arith.constant 0 : index
    %c0_24 = arith.constant 0 : index
    %38 = vector.load %arg9[%c0_23, %c0_24] : memref<128x128xbf16, #tpu.memory_space<vmem>>, vector<128x128xbf16>
    %cst_25 = arith.constant dense<0.000000e+00> : vector<8x128xf32>
    %39 = tpu.matmul %37, %38, %cst_25 {dimension_numbers = #tpu.dot_dimension_numbers<[1], [0], [0], [1], [0, 0, 1, 1], [], []>} : vector<8x128xbf16>, vector<128x128xbf16>, vector<8x128xf32> -> vector<8x128xf32>
    %c0_26 = arith.constant 0 : index
    %c0_27 = arith.constant 0 : index
    %40 = vector.load %arg10[%c0_26, %c0_27] : memref<1x128xf32, #tpu.memory_space<vmem>>, vector<1x128xf32>
    %41 = vector.broadcast %40 : vector<1x128xf32> to vector<8x128xf32>
    %42 = arith.addf %39, %41 : vector<8x128xf32>
    %c0_28 = arith.constant 0 : index
    %c0_29 = arith.constant 0 : index
    %c0_30 = arith.constant 0 : index
    %43 = vector.load %arg11[%c0_28, %c0_29, %c0_30] : memref<1x8x128xf32, #tpu.memory_space<vmem>>, vector<1x8x128xf32>
    %44 = vector.shape_cast %43 : vector<1x8x128xf32> to vector<8x128xf32>
    %45 = vector.shape_cast %42 : vector<8x128xf32> to vector<1x8x128xf32>
    tpu.vector_store %arg11[%c0_28, %c0_29, %c0_30], %45 {strides = array<i32>} : memref<1x8x128xf32, #tpu.memory_space<vmem>>, vector<1x8x128xf32>,
    return
  }
  func.func @transform_0(%arg0: i32, %arg1: i32) -> (i32, i32, i32) {
    %c0_i32 = arith.constant 0 : i32
    %c0_i32_0 = arith.constant 0 : i32
    return %arg0, %arg1, %c0_i32 : i32, i32, i32
  }
  func.func @transform_1(%arg0: i32, %arg1: i32) -> (i32, i32, i32) {
    %c1_i32 = arith.constant 1 : i32
    %0 = arith.muli %arg1, %c1_i32 : i32
    %c1_i32_0 = arith.constant 1 : i32
    %1 = arith.subi %0, %c1_i32_0 : i32
    %c0_i32 = arith.constant 0 : i32
    %2 = arith.maxsi %1, %c0_i32 : i32
    %c0_i32_1 = arith.constant 0 : i32
    %c0_i32_2 = arith.constant 0 : i32
    return %arg0, %2, %c0_i32_1 : i32, i32, i32
  }
  func.func @transform_2(%arg0: i32, %arg1: i32) -> (i32, i32, i32) {
    %c1_i32 = arith.constant 1 : i32
    %0 = arith.addi %arg1, %c1_i32 : i32
    %c1_i32_0 = arith.constant 1 : i32
    %1 = arith.muli %0, %c1_i32_0 : i32
    %c0_i32 = arith.constant 0 : i32
    %2 = arith.minsi %1, %c0_i32 : i32
    %c0_i32_1 = arith.constant 0 : i32
    %c0_i32_2 = arith.constant 0 : i32
    return %arg0, %2, %c0_i32_1 : i32, i32, i32
  }
  func.func @transform_3(%arg0: i32, %arg1: i32) -> (i32, i32) {
    %c0_i32 = arith.constant 0 : i32
    %c0_i32_0 = arith.constant 0 : i32
    %c0_i32_1 = arith.constant 0 : i32
    return %c0_i32, %c0_i32_0 : i32, i32
  }
  func.func @transform_4(%arg0: i32, %arg1: i32) -> (i32, i32) {
    %c0_i32 = arith.constant 0 : i32
    %c0_i32_0 = arith.constant 0 : i32
    %c0_i32_1 = arith.constant 0 : i32
    return %c0_i32, %c0_i32_0 : i32, i32
  }
  func.func @transform_5(%arg0: i32, %arg1: i32) -> (i32, i32) {
    %c0_i32 = arith.constant 0 : i32
    %c0_i32_0 = arith.constant 0 : i32
    %c0_i32_1 = arith.constant 0 : i32
    return %c0_i32, %c0_i32_0 : i32, i32
  }
  func.func @transform_6(%arg0: i32, %arg1: i32) -> (i32, i32) {
    %c0_i32 = arith.constant 0 : i32
    %c0_i32_0 = arith.constant 0 : i32
    %c0_i32_1 = arith.constant 0 : i32
    return %c0_i32, %c0_i32_0 : i32, i32
  }
  func.func @transform_7(%arg0: i32, %arg1: i32) -> (i32, i32) {
    %c0_i32 = arith.constant 0 : i32
    %c0_i32_0 = arith.constant 0 : i32
    %c0_i32_1 = arith.constant 0 : i32
    return %c0_i32, %c0_i32_0 : i32, i32
  }
  func.func @transform_8(%arg0: i32, %arg1: i32) -> (i32, i32) {
    %c0_i32 = arith.constant 0 : i32
    %c0_i32_0 = arith.constant 0 : i32
    %c0_i32_1 = arith.constant 0 : i32
    return %c0_i32, %c0_i32_0 : i32, i32
  }
  func.func @transform_9(%arg0: i32, %arg1: i32) -> (i32, i32, i32) {
    %c0_i32 = arith.constant 0 : i32
    %c0_i32_0 = arith.constant 0 : i32
    return %arg0, %arg1, %c0_i32 : i32, i32, i32
  }
}

</mosaic_0001>

<llo_original>
// kernel: sparse_kernel1d_forward.1
$region0: #{sparse_kernel1d_forward.1}
  #allocation0 [shape = 'u32[]', space=smem, size = 0x4, offset = 0x4, fixed_abs, tag = 'smem constant byte address 0x4 - core index']
  #allocation1 [shape = 'u32[144,128]{1,0:T(1,128)}', space=vmem, size = 0x12000, scoped, tag = 'internal scratch']
  %s0 = inlined_call_operand.vmem [shape: bf16[2,8,128], index: 0, kind: input, shape index: {}, may-alias: {0,1,2}]
  %s1 = inlined_call_operand.vmem [shape: bf16[2,8,128], index: 1, kind: input, shape index: {}, may-alias: {0,1,2}]
  %s2 = inlined_call_operand.vmem [shape: bf16[2,8,128], index: 2, kind: input, shape index: {}, may-alias: {0,1,2}]
  %s3 = inlined_call_operand.vmem [shape: bf16[128,128], index: 3, kind: input, shape index: {}]
  %s4 = inlined_call_operand.vmem [shape: bf16[32,128], index: 4, kind: input, shape index: {}]
  %s5 = inlined_call_operand.vmem [shape: bf16[32,128], index: 5, kind: input, shape index: {}]
  %s6 = inlined_call_operand.vmem [shape: f32[1,128], index: 6, kind: input, shape index: {}]
  %s7 = inlined_call_operand.vmem [shape: bf16[128,128], index: 7, kind: input, shape index: {}]
  %s8 = inlined_call_operand.vmem [shape: f32[1,128], index: 8, kind: input, shape index: {}]
  %s9 = inlined_call_operand.vmem [shape: f32[2,8,128], index: 9, kind: output, shape index: {}]
  %s10 = sld [smem:[#allocation0]]
  $region69: #{sparse_kernel1d_forward.1} parent=0
    _
  %s12 = ssub.s32 1, %s10
  %s13 = scalar_select 0, %s12, %s10
  loop: start=0, step=1, limit=4
  $region2: #{sparse_kernel1d_forward.1} parent=0 // loop_pre_header
    _
  $region3: #{sparse_kernel1d_forward.1} parent=0 // loop_header
    %s15 = sphi 0, %s19
    %p16 = scmp.ge.s32.totalorder %s15, 4
    %s22 = sphi 0, %s34
    %s23 = sphi 0, %s30
    %s24 = sphi 0, %s22
    %s25 = sphi 0, %s23
    %s26 = sphi 0, %s24
    %s27 = sphi 0, %s25
    %s39 = sphi 0, %s41
    %s42 = sphi 0, %s39
    %s43 = sphi 0, %s42
    %s59 = sphi 0, %s43
    %s73 = sphi 0, %s75
    %s76 = sphi 0, %s73
    %s77 = sphi 0, %s76
    %s93 = sphi 0, %s77
    %s107 = sphi 0, %s109
    %s110 = sphi 0, %s107
    %s111 = sphi 0, %s110
    %s127 = sphi 0, %s111
    %s131 = sphi 0, %s131
    %s133 = sphi 0, %s131
    %s134 = sphi 0, %s133
    %s148 = sphi 0, %s134
    %s152 = sphi 0, %s152
    %s154 = sphi 0, %s152
    %s155 = sphi 0, %s154
    %s169 = sphi 0, %s155
    %s173 = sphi 0, %s173
    %s175 = sphi 0, %s173
    %s176 = sphi 0, %s175
    %s190 = sphi 0, %s176
    %s194 = sphi 0, %s194
    %s196 = sphi 0, %s194
    %s197 = sphi 0, %s196
    %s211 = sphi 0, %s197
    %s215 = sphi 0, %s215
    %s217 = sphi 0, %s215
    %s218 = sphi 0, %s217
    %s232 = sphi 0, %s218
    %s236 = sphi 0, %s236
    %s238 = sphi 0, %s236
    %s239 = sphi 0, %s238
    %s253 = sphi 0, %s239
    %s261 = sphi 0, %s263
    %s264 = sphi 0, %s261
    %s265 = sphi 0, %s264
    %s281 = sphi 0, %s265
  $region4: #{sparse_kernel1d_forward.1} parent=0 // loop_header_branch
    %18 = sbr.rel (%p16) target = $region8
  $region5: #{sparse_kernel1d_forward.1} parent=0 // loop_body
    %s20 = ssub.s32 %s15, 1
    %s21 = ssub.s32 %s15, 2
    %s28 = sadd.s32 1, %s23
    %p29 = scmp.ge.s32.totalorder %s28, 1
    %s30 = scalar_select %p29, 0, %s28
    %s31 = sadd.s32 1, %s22
    %s32 = scalar_select %p29, %s31, %s22
    %p33 = scmp.ge.s32.totalorder %s32, 2
    %s34 = scalar_select %p33, 0, %s32
    %s35 = ssub.s32 %s22, %s34
    %s36 = ssub.s32 %s23, %s30
    %s37 = sor.u32 %s35, %s36
    %p38 = scmp.eq.s32.totalorder %s37, 0
    %s40 = sadd.s32 %s39, 1
    %s41 = scalar_select %p38, %s39, %s40
    %p44 = pneg %p38
    %p45 = scmp.eq.s32.totalorder %s15, 1
    %p46 = por %p44, %p45
    %p47 = scmp.ne.s32.totalorder %s39, %s42
    %p48 = scmp.eq.s32.totalorder %s15, 0
    %p49 = por %p47, %p48
    %p50 = scmp.ne.s32.totalorder %s39, %s42
    %p51 = scmp.eq.s32.totalorder %s20, 1
    %p52 = por %p50, %p51
    %p53 = scmp.ne.s32.totalorder %s42, %s43
    %p54 = scmp.eq.s32.totalorder %s20, 0
    %p55 = por %p53, %p54
    %p56 = scmp.ne.s32.totalorder %s42, %s43
    %p57 = scmp.eq.s32.totalorder %s21, 1
    %p58 = por %p56, %p57
    %p60 = scmp.ne.s32.totalorder %s43, %s59
    %p61 = scmp.eq.s32.totalorder %s21, 0
    %p62 = por %p60, %p61
    %s63 = ssub.s32 %s23, 1
    %p64 = scmp.gt.s32.totalorder %s63, 0
    %s65 = scalar_select %p64, %s63, 0
    %s66 = ssub.s32 %s30, 1
    %p67 = scmp.gt.s32.totalorder %s66, 0
    %s68 = scalar_select %p67, %s66, 0
    %s69 = ssub.s32 %s22, %s34
    %s70 = ssub.s32 %s65, %s68
    %s71 = sor.u32 %s69, %s70
    %p72 = scmp.eq.s32.totalorder %s71, 0
    %s74 = sadd.s32 %s73, 1
    %s75 = scalar_select %p72, %s73, %s74
    %p78 = pneg %p72
    %p79 = scmp.eq.s32.totalorder %s15, 1
    %p80 = por %p78, %p79
    %p81 = scmp.ne.s32.totalorder %s73, %s76
    %p82 = scmp.eq.s32.totalorder %s15, 0
    %p83 = por %p81, %p82
    %p84 = scmp.ne.s32.totalorder %s73, %s76
    %p85 = scmp.eq.s32.totalorder %s20, 1
    %p86 = por %p84, %p85
    %p87 = scmp.ne.s32.totalorder %s76, %s77
    %p88 = scmp.eq.s32.totalorder %s20, 0
    %p89 = por %p87, %p88
    %p90 = scmp.ne.s32.totalorder %s76, %s77
    %p91 = scmp.eq.s32.totalorder %s21, 1
    %p92 = por %p90, %p91
    %p94 = scmp.ne.s32.totalorder %s77, %s93
    %p95 = scmp.eq.s32.totalorder %s21, 0
    %p96 = por %p94, %p95
    %s97 = sadd.s32 %s23, 1
    %p98 = scmp.lt.s32.totalorder %s97, 0
    %s99 = scalar_select %p98, %s97, 0
    %s100 = sadd.s32 %s30, 1
    %p101 = scmp.lt.s32.totalorder %s100, 0
    %s102 = scalar_select %p101, %s100, 0
    %s103 = ssub.s32 %s22, %s34
    %s104 = ssub.s32 %s99, %s102
    %s105 = sor.u32 %s103, %s104
    %p106 = scmp.eq.s32.totalorder %s105, 0
    %s108 = sadd.s32 %s107, 1
    %s109 = scalar_select %p106, %s107, %s108
    %p112 = pneg %p106
    %p113 = scmp.eq.s32.totalorder %s15, 1
    %p114 = por %p112, %p113
    %p115 = scmp.ne.s32.totalorder %s107, %s110
    %p116 = scmp.eq.s32.totalorder %s15, 0
    %p117 = por %p115, %p116
    %p118 = scmp.ne.s32.totalorder %s107, %s110
    %p119 = scmp.eq.s32.totalorder %s20, 1
    %p120 = por %p118, %p119
    %p121 = scmp.ne.s32.totalorder %s110, %s111
    %p122 = scmp.eq.s32.totalorder %s20, 0
    %p123 = por %p121, %p122
    %p124 = scmp.ne.s32.totalorder %s110, %s111
    %p125 = scmp.eq.s32.totalorder %s21, 1
    %p126 = por %p124, %p125
    %p128 = scmp.ne.s32.totalorder %s111, %s127
    %p129 = scmp.eq.s32.totalorder %s21, 0
    %p130 = por %p128, %p129
    %s132 = sadd.s32 %s131, 1
    %p135 = scmp.eq.s32.totalorder %s15, 1
    %p136 = scmp.ne.s32.totalorder %s131, %s133
    %p137 = scmp.eq.s32.totalorder %s15, 0
    %p138 = por %p136, %p137
    %p139 = scmp.ne.s32.totalorder %s131, %s133
    %p140 = scmp.eq.s32.totalorder %s20, 1
    %p141 = por %p139, %p140
    %p142 = scmp.ne.s32.totalorder %s133, %s134
    %p143 = scmp.eq.s32.totalorder %s20, 0
    %p144 = por %p142, %p143
    %p145 = scmp.ne.s32.totalorder %s133, %s134
    %p146 = scmp.eq.s32.totalorder %s21, 1
    %p147 = por %p145, %p146
    %p149 = scmp.ne.s32.totalorder %s134, %s148
    %p150 = scmp.eq.s32.totalorder %s21, 0
    %p151 = por %p149, %p150
    %s153 = sadd.s32 %s152, 1
    %p156 = scmp.eq.s32.totalorder %s15, 1
    %p157 = scmp.ne.s32.totalorder %s152, %s154
    %p158 = scmp.eq.s32.totalorder %s15, 0
    %p159 = por %p157, %p158
    %p160 = scmp.ne.s32.totalorder %s152, %s154
    %p161 = scmp.eq.s32.totalorder %s20, 1
    %p162 = por %p160, %p161
    %p163 = scmp.ne.s32.totalorder %s154, %s155
    %p164 = scmp.eq.s32.totalorder %s20, 0
    %p165 = por %p163, %p164
    %p166 = scmp.ne.s32.totalorder %s154, %s155
    %p167 = scmp.eq.s32.totalorder %s21, 1
    %p168 = por %p166, %p167
    %p170 = scmp.ne.s32.totalorder %s155, %s169
    %p171 = scmp.eq.s32.totalorder %s21, 0
    %p172 = por %p170, %p171
    %s174 = sadd.s32 %s173, 1
    %p177 = scmp.eq.s32.totalorder %s15, 1
    %p178 = scmp.ne.s32.totalorder %s173, %s175
    %p179 = scmp.eq.s32.totalorder %s15, 0
    %p180 = por %p178, %p179
    %p181 = scmp.ne.s32.totalorder %s173, %s175
    %p182 = scmp.eq.s32.totalorder %s20, 1
    %p183 = por %p181, %p182
    %p184 = scmp.ne.s32.totalorder %s175, %s176
    %p185 = scmp.eq.s32.totalorder %s20, 0
    %p186 = por %p184, %p185
    %p187 = scmp.ne.s32.totalorder %s175, %s176
    %p188 = scmp.eq.s32.totalorder %s21, 1
    %p189 = por %p187, %p188
    %p191 = scmp.ne.s32.totalorder %s176, %s190
    %p192 = scmp.eq.s32.totalorder %s21, 0
    %p193 = por %p191, %p192
    %s195 = sadd.s32 %s194, 1
    %p198 = scmp.eq.s32.totalorder %s15, 1
    %p199 = scmp.ne.s32.totalorder %s194, %s196
    %p200 = scmp.eq.s32.totalorder %s15, 0
    %p201 = por %p199, %p200
    %p202 = scmp.ne.s32.totalorder %s194, %s196
    %p203 = scmp.eq.s32.totalorder %s20, 1
    %p204 = por %p202, %p203
    %p205 = scmp.ne.s32.totalorder %s196, %s197
    %p206 = scmp.eq.s32.totalorder %s20, 0
    %p207 = por %p205, %p206
    %p208 = scmp.ne.s32.totalorder %s196, %s197
    %p209 = scmp.eq.s32.totalorder %s21, 1
    %p210 = por %p208, %p209
    %p212 = scmp.ne.s32.totalorder %s197, %s211
    %p213 = scmp.eq.s32.totalorder %s21, 0
    %p214 = por %p212, %p213
    %s216 = sadd.s32 %s215, 1
    %p219 = scmp.eq.s32.totalorder %s15, 1
    %p220 = scmp.ne.s32.totalorder %s215, %s217
    %p221 = scmp.eq.s32.totalorder %s15, 0
    %p222 = por %p220, %p221
    %p223 = scmp.ne.s32.totalorder %s215, %s217
    %p224 = scmp.eq.s32.totalorder %s20, 1
    %p225 = por %p223, %p224
    %p226 = scmp.ne.s32.totalorder %s217, %s218
    %p227 = scmp.eq.s32.totalorder %s20, 0
    %p228 = por %p226, %p227
    %p229 = scmp.ne.s32.totalorder %s217, %s218
    %p230 = scmp.eq.s32.totalorder %s21, 1
    %p231 = por %p229, %p230
    %p233 = scmp.ne.s32.totalorder %s218, %s232
    %p234 = scmp.eq.s32.totalorder %s21, 0
    %p235 = por %p233, %p234
    %s237 = sadd.s32 %s236, 1
    %p240 = scmp.eq.s32.totalorder %s15, 1
    %p241 = scmp.ne.s32.totalorder %s236, %s238
    %p242 = scmp.eq.s32.totalorder %s15, 0
    %p243 = por %p241, %p242
    %p244 = scmp.ne.s32.totalorder %s236, %s238
    %p245 = scmp.eq.s32.totalorder %s20, 1
    %p246 = por %p244, %p245
    %p247 = scmp.ne.s32.totalorder %s238, %s239
    %p248 = scmp.eq.s32.totalorder %s20, 0
    %p249 = por %p247, %p248
    %p250 = scmp.ne.s32.totalorder %s238, %s239
    %p251 = scmp.eq.s32.totalorder %s21, 1
    %p252 = por %p250, %p251
    %p254 = scmp.ne.s32.totalorder %s239, %s253
    %p255 = scmp.eq.s32.totalorder %s21, 0
    %p256 = por %p254, %p255
    %s257 = ssub.s32 %s22, %s34
    %s258 = ssub.s32 %s23, %s30
    %s259 = sor.u32 %s257, %s258
    %p260 = scmp.eq.s32.totalorder %s259, 0
    %s262 = sadd.s32 %s261, 1
    %s263 = scalar_select %p260, %s261, %s262
    %p266 = pneg %p260
    %p267 = scmp.eq.s32.totalorder %s15, 1
    %p268 = por %p266, %p267
    %p269 = scmp.ne.s32.totalorder %s261, %s264
    %p270 = scmp.eq.s32.totalorder %s15, 0
    %p271 = por %p269, %p270
    %p272 = scmp.ne.s32.totalorder %s261, %s264
    %p273 = scmp.eq.s32.totalorder %s20, 1
    %p274 = por %p272, %p273
    %p275 = scmp.ne.s32.totalorder %s264, %s265
    %p276 = scmp.eq.s32.totalorder %s20, 0
    %p277 = por %p275, %p276
    %p278 = scmp.ne.s32.totalorder %s264, %s265
    %p279 = scmp.eq.s32.totalorder %s21, 1
    %p280 = por %p278, %p279
    %p282 = scmp.ne.s32.totalorder %s265, %s281
    %p283 = scmp.eq.s32.totalorder %s21, 0
    %p284 = por %p282, %p283
    %p285 = scmp.le.s32.totalorder 1, %s15
    %p286 = scmp.lt.s32.totalorder %s15, 3
    %p287 = pnand %p285, %p286
    %p288 = pneg %p287
    // Predicated region
    $region9: #{sparse_kernel1d_forward.1} parent=5 // pred_check
      _
    $region10: #{sparse_kernel1d_forward.1} parent=5 // pred_check_branch
      %290 = sbr.rel (%p287) target = $region12
    $region11: #{sparse_kernel1d_forward.1} parent=5 // pred_region
      %s291 = ssub.s32 %s15, 1
      // Predicated region
      $region13: #{sparse_kernel1d_forward.1} parent=11 // pred_check
        %p292 = pneg %p144
      $region14: #{sparse_kernel1d_forward.1} parent=11 // pred_check_branch
        %294 = sbr.rel (%p292) target = $region16
      $region15: #{sparse_kernel1d_forward.1} parent=11 // pred_region
        _
      $region16: #{sparse_kernel1d_forward.1} parent=11 // pred_fallthru
        _
      // Predicated region
      $region17: #{sparse_kernel1d_forward.1} parent=11 // pred_check
        %p295 = pneg %p165
      $region18: #{sparse_kernel1d_forward.1} parent=11 // pred_check_branch
        %297 = sbr.rel (%p295) target = $region20
      $region19: #{sparse_kernel1d_forward.1} parent=11 // pred_region
        _
      $region20: #{sparse_kernel1d_forward.1} parent=11 // pred_fallthru
        _
      // Predicated region
      $region21: #{sparse_kernel1d_forward.1} parent=11 // pred_check
        %p298 = pneg %p186
      $region22: #{sparse_kernel1d_forward.1} parent=11 // pred_check_branch
        %300 = sbr.rel (%p298) target = $region24
      $region23: #{sparse_kernel1d_forward.1} parent=11 // pred_region
        _
      $region24: #{sparse_kernel1d_forward.1} parent=11 // pred_fallthru
        _
      // Predicated region
      $region25: #{sparse_kernel1d_forward.1} parent=11 // pred_check
        %p301 = pneg %p207
      $region26: #{sparse_kernel1d_forward.1} parent=11 // pred_check_branch
        %303 = sbr.rel (%p301) target = $region28
      $region27: #{sparse_kernel1d_forward.1} parent=11 // pred_region
        _
      $region28: #{sparse_kernel1d_forward.1} parent=11 // pred_fallthru
        _
      // Predicated region
      $region29: #{sparse_kernel1d_forward.1} parent=11 // pred_check
        %p304 = pneg %p228
      $region30: #{sparse_kernel1d_forward.1} parent=11 // pred_check_branch
        %306 = sbr.rel (%p304) target = $region32
      $region31: #{sparse_kernel1d_forward.1} parent=11 // pred_region
        _
      $region32: #{sparse_kernel1d_forward.1} parent=11 // pred_fallthru
        _
      // Predicated region
      $region33: #{sparse_kernel1d_forward.1} parent=11 // pred_check
        %p307 = pneg %p249
      $region34: #{sparse_kernel1d_forward.1} parent=11 // pred_check_branch
        %309 = sbr.rel (%p307) target = $region36
      $region35: #{sparse_kernel1d_forward.1} parent=11 // pred_region
        _
      $region36: #{sparse_kernel1d_forward.1} parent=11 // pred_fallthru
        _
    $region12: #{sparse_kernel1d_forward.1} parent=5 // pred_fallthru
      _
    %p310 = scmp.lt.s32.totalorder %s15, 2
    // Predicated region
    $region37: #{sparse_kernel1d_forward.1} parent=5 // pred_check
      %p311 = pneg %p310
    $region38: #{sparse_kernel1d_forward.1} parent=5 // pred_check_branch
      %313 = sbr.rel (%p311) target = $region40
    $region39: #{sparse_kernel1d_forward.1} parent=5 // pred_region
      // Predicated region
      $region41: #{sparse_kernel1d_forward.1} parent=39 // pred_check
        %p314 = pneg %p49
      $region42: #{sparse_kernel1d_forward.1} parent=39 // pred_check_branch
        %316 = sbr.rel (%p314) target = $region44
      $region43: #{sparse_kernel1d_forward.1} parent=39 // pred_region
        %p317 = scmp.lt.s32.totalorder %s22, 1
        %s318 = scalar_select %p317, %s22, 1
        %p319 = scmp.lt.s32.totalorder %s23, 0
        %s320 = scalar_select %p319, %s23, 0
        %s321 = sadd.s32 %s320, %s318
        %s322 = smul.addr %s321, 4
        %s323 = scalar_lea.vmem %s0, %s322
      $region44: #{sparse_kernel1d_forward.1} parent=39 // pred_fallthru
        _
      // Predicated region
      $region45: #{sparse_kernel1d_forward.1} parent=39 // pred_check
        %p324 = pneg %p83
      $region46: #{sparse_kernel1d_forward.1} parent=39 // pred_check_branch
        %326 = sbr.rel (%p324) target = $region48
      $region47: #{sparse_kernel1d_forward.1} parent=39 // pred_region
        %s327 = ssub.s32 %s23, 1
        %p328 = scmp.gt.s32.totalorder %s327, 0
        %s329 = scalar_select %p328, %s327, 0
        %p330 = scmp.lt.s32.totalorder %s22, 1
        %s331 = scalar_select %p330, %s22, 1
        %p332 = scmp.lt.s32.totalorder %s329, 0
        %s333 = scalar_select %p332, %s329, 0
        %s334 = sadd.s32 %s333, %s331
        %s335 = smul.addr %s334, 4
        %s336 = scalar_lea.vmem %s1, %s335
        %s337 = ssub.s32 %s23, 1
        %p338 = scmp.gt.s32.totalorder %s337, 0
        %s339 = scalar_select %p338, %s337, 0
      $region48: #{sparse_kernel1d_forward.1} parent=39 // pred_fallthru
        _
      // Predicated region
      $region49: #{sparse_kernel1d_forward.1} parent=39 // pred_check
        %p340 = pneg %p117
      $region50: #{sparse_kernel1d_forward.1} parent=39 // pred_check_branch
        %342 = sbr.rel (%p340) target = $region52
      $region51: #{sparse_kernel1d_forward.1} parent=39 // pred_region
        %s343 = sadd.s32 %s23, 1
        %p344 = scmp.lt.s32.totalorder %s343, 0
        %s345 = scalar_select %p344, %s343, 0
        %p346 = scmp.lt.s32.totalorder %s22, 1
        %s347 = scalar_select %p346, %s22, 1
        %p348 = scmp.lt.s32.totalorder %s345, 0
        %s349 = scalar_select %p348, %s345, 0
        %s350 = sadd.s32 %s349, %s347
        %s351 = smul.addr %s350, 4
        %s352 = scalar_lea.vmem %s2, %s351
        %s353 = sadd.s32 %s23, 1
        %p354 = scmp.lt.s32.totalorder %s353, 0
        %s355 = scalar_select %p354, %s353, 0
      $region52: #{sparse_kernel1d_forward.1} parent=39 // pred_fallthru
        _
    $region40: #{sparse_kernel1d_forward.1} parent=5 // pred_fallthru
      _
    %p356 = scmp.le.s32.totalorder 1, %s15
    %p357 = scmp.lt.s32.totalorder %s15, 3
    %p358 = pnand %p356, %p357
    %p359 = pneg %p358
    // Predicated region
    $region53: #{sparse_kernel1d_forward.1} parent=5 // pred_check
      _
    $region54: #{sparse_kernel1d_forward.1} parent=5 // pred_check_branch
      %361 = sbr.rel (%p358) target = $region56
    $region55: #{sparse_kernel1d_forward.1} parent=5 // pred_region
      %s362 = ssub.s32 %s15, 1
      %p363 = scmp.lt.s32.totalorder %s24, 1
      %s364 = scalar_select %p363, %s24, 1
      %p365 = scmp.lt.s32.totalorder %s25, 0
      %s366 = scalar_select %p365, %s25, 0
      %s367 = sadd.s32 %s366, %s364
      %s368 = smul.addr %s367, 4
      %s369 = scalar_lea.vmem %s0, %s368
      %p370 = pneg %p55
      %p371 = pneg %p52
      %s372 = ssub.s32 %s25, 1
      %p373 = scmp.gt.s32.totalorder %s372, 0
      %s374 = scalar_select %p373, %s372, 0
      %p375 = scmp.lt.s32.totalorder %s24, 1
      %s376 = scalar_select %p375, %s24, 1
      %p377 = scmp.lt.s32.totalorder %s374, 0
      %s378 = scalar_select %p377, %s374, 0
      %s379 = sadd.s32 %s378, %s376
      %s380 = smul.addr %s379, 4
      %s381 = scalar_lea.vmem %s1, %s380
      %p382 = pneg %p89
      %p383 = pneg %p86
      %s384 = sadd.s32 %s25, 1
      %p385 = scmp.lt.s32.totalorder %s384, 0
      %s386 = scalar_select %p385, %s384, 0
      %p387 = scmp.lt.s32.totalorder %s24, 1
      %s388 = scalar_select %p387, %s24, 1
      %p389 = scmp.lt.s32.totalorder %s386, 0
      %s390 = scalar_select %p389, %s386, 0
      %s391 = sadd.s32 %s390, %s388
      %s392 = smul.addr %s391, 4
      %s393 = scalar_lea.vmem %s2, %s392
      %p394 = pneg %p123
      %p395 = pneg %p120
      %p396 = pneg %p144
      %p397 = pneg %p141
      %p398 = pneg %p165
      %p399 = pneg %p162
      %p400 = pneg %p186
      %p401 = pneg %p183
      %p402 = pneg %p207
      %p403 = pneg %p204
      %p404 = pneg %p228
      %p405 = pneg %p225
      %p406 = pneg %p249
      %p407 = pneg %p246
      %p408 = pneg %p277
      %p409 = pneg %p274
      %p410 = scmp.lt.s32.totalorder %s24, 1
      %s411 = scalar_select %p410, %s24, 1
      %p412 = scmp.lt.s32.totalorder %s25, 0
      %s413 = scalar_select %p412, %s25, 0
      %s414 = sadd.s32 %s413, %s411
      %s415 = smul.addr %s414, 8
      %s416 = scalar_lea.vmem %s9, %s415
      %p417 = scmp.lt.s32.totalorder %s24, 1
      %s418 = scalar_select %p417, %s24, 1
      %p419 = scmp.lt.s32.totalorder %s25, 0
      %s420 = scalar_select %p419, %s25, 0
      %s421 = sadd.s32 %s420, %s418
      %s422 = smul.addr %s421, 4
      %s423 = scalar_lea.vmem %s0, %s422
      %s424 = ssub.s32 %s25, 1
      %p425 = scmp.gt.s32.totalorder %s424, 0
      %s426 = scalar_select %p425, %s424, 0
      %p427 = scmp.lt.s32.totalorder %s24, 1
      %s428 = scalar_select %p427, %s24, 1
      %p429 = scmp.lt.s32.totalorder %s426, 0
      %s430 = scalar_select %p429, %s426, 0
      %s431 = sadd.s32 %s430, %s428
      %s432 = smul.addr %s431, 4
      %s433 = scalar_lea.vmem %s1, %s432
      %s434 = ssub.s32 %s25, 1
      %p435 = scmp.gt.s32.totalorder %s434, 0
      %s436 = scalar_select %p435, %s434, 0
      %s437 = sadd.s32 %s25, 1
      %p438 = scmp.lt.s32.totalorder %s437, 0
      %s439 = scalar_select %p438, %s437, 0
      %p440 = scmp.lt.s32.totalorder %s24, 1
      %s441 = scalar_select %p440, %s24, 1
      %p442 = scmp.lt.s32.totalorder %s439, 0
      %s443 = scalar_select %p442, %s439, 0
      %s444 = sadd.s32 %s443, %s441
      %s445 = smul.addr %s444, 4
      %s446 = scalar_lea.vmem %s2, %s445
      %s447 = sadd.s32 %s25, 1
      %p448 = scmp.lt.s32.totalorder %s447, 0
      %s449 = scalar_select %p448, %s447, 0
      %p450 = scmp.lt.s32.totalorder %s24, 1
      %s451 = scalar_select %p450, %s24, 1
      %p452 = scmp.lt.s32.totalorder %s25, 0
      %s453 = scalar_select %p452, %s25, 0
      %s454 = sadd.s32 %s453, %s451
      %s455 = smul.addr %s454, 8
      %s456 = scalar_lea.vmem %s9, %s455
      %v458 = vld [vmem:[%s423] sm:$0xf]
      %v459 = vld [vmem:[%s433] sm:$0x8]
      %v460 = vld [vmem:[%s446] sm:$0x1]
      %p461 = scmp.gt.s32.totalorder %s25, 0
      %s462 = scalar_select %p461, 1, 0
      %v463 = vstv %s462
      %vm464 = vcmp.eq.s32.totalorder %v463, 1
      %v465 = vsel %vm464, %v459, 0
      %p466 = scmp.lt.s32.totalorder %s25, 0
      %s467 = scalar_select %p466, 1, 0
      %v468 = vstv %s467
      %vm469 = vcmp.eq.s32.totalorder %v468, 1
      %v470 = vsel %vm469, %v460, 0
      %v472 = vunpack.c.l.b16 %v465
      %v473 = vpack.c.b16 %v472, %v472
      %v475 = vshrl.u32 %v473, 16
      %v477 = vrot.slane %v475, 3
      %v480 = vunpack.c.l.b16 %v458
      %v481 = vpack.c.b16 %v480, %v480
      %v483 = vshrl.u32 %v481, 16
      %v485 = vrot.slane %v483, 7
      %v486 = vshll.u32 %v481, 16
      %v488 = vor.u32 %v485, %v486
      %vm490 = vcmask 1040384
      %vm491 = vsmask.f32 256
      %vm492 = vmand %vm490, %vm491
      %v493 = vsel %vm492, %v477, %v488
      %v494 = vrot.slane %v486, 1
      %v495 = vor.u32 %v483, %v494
      %v498 = vunpack.c.l.b16 %v470
      %v499 = vpack.c.b16 %v498, %v498
      %v501 = vshll.u32 %v499, 16
      %v503 = vrot.slane %v501, 5
      %vm505 = vcmask 1043456
      %vm506 = vsmask.f32 3328
      %vm507 = vmand %vm505, %vm506
      %v508 = vsel %vm507, %v495, %v503
      %v509 = vld [vmem:[%s3] sm:$0xf]
      %v510 = vld [vmem:[%s3 + $0x4] sm:$0xf]
      %v511 = vld [vmem:[%s3 + $0x8] sm:$0xf]
      %v512 = vld [vmem:[%s3 + $0xc] sm:$0xf]
      %v513 = vld [vmem:[%s3 + $0x10] sm:$0xf]
      %v514 = vld [vmem:[%s3 + $0x14] sm:$0xf]
      %v515 = vld [vmem:[%s3 + $0x18] sm:$0xf]
      %v516 = vld [vmem:[%s3 + $0x1c] sm:$0xf]
      %v517 = vld [vmem:[%s3 + $0x20] sm:$0xf]
      %v518 = vld [vmem:[%s3 + $0x24] sm:$0xf]
      %v519 = vld [vmem:[%s3 + $0x28] sm:$0xf]
      %v520 = vld [vmem:[%s3 + $0x2c] sm:$0xf]
      %v521 = vld [vmem:[%s3 + $0x30] sm:$0xf]
      %v522 = vld [vmem:[%s3 + $0x34] sm:$0xf]
      %v523 = vld [vmem:[%s3 + $0x38] sm:$0xf]
      %v524 = vld [vmem:[%s3 + $0x3c] sm:$0xf]
      %v525 = vld [vmem:[%s4] sm:$0xf]
      %v526 = vld [vmem:[%s4 + $0x4] sm:$0xf]
      %v527 = vld [vmem:[%s4 + $0x8] sm:$0xf]
      %v528 = vld [vmem:[%s4 + $0xc] sm:$0xf]
      %530 = vrot.lane.b32.xlu0 %v493, 32
      %v531 = vpop.permute.xlu0 %530
      %v536 = vunpack.c.l.b16 %v525
      %v537 = vunpack.c.l.b16 %v526
      %v538 = vunpack.c.l.b16 %v527
      %v539 = vunpack.c.l.b16 %v528
      %v540 = vpack.c.b16 %v537, %v536
      %v541 = vpack.c.b16 %v539, %v538
      %vm544 = vcmask 261120
      %v546 = vsel %vm544, %v531, 0
      %548 = vmatprep.subr.bf16.mxu0 0
      %549 = vmatpush1.bf16.msra.mxu0 %v540
      %550 = vmatprep.subr.bf16.mxu0 0
      %551 = vmatpush1.bf16.msra.mxu0 %v541
      %552 = vmatprep.subr.bf16.mxu0 0
      %553 = vmatpush1.bf16.msra.mxu0 0
      %554 = vmatprep.subr.bf16.mxu0 0
      %555 = vmatpush1.bf16.msra.mxu0 0
      %556 = vmatprep.subr.bf16.mxu0 0
      %557 = vmatpush1.bf16.msra.mxu0 0
      %558 = vmatprep.subr.bf16.mxu0 0
      %559 = vmatpush1.bf16.msra.mxu0 0
      %560 = vmatprep.subr.bf16.mxu0 0
      %561 = vmatpush1.bf16.msra.mxu0 0
      %562 = vmatprep.subr.bf16.mxu0 0
      %563 = vmatpush1.bf16.msra.mxu0 0
      %564 = vmatprep.subr.bf16.mxu0 0
      %565 = vmatpush1.bf16.msra.mxu0 0
      %566 = vmatprep.subr.bf16.mxu0 0
      %567 = vmatpush1.bf16.msra.mxu0 0
      %568 = vmatprep.subr.bf16.mxu0 0
      %569 = vmatpush1.bf16.msra.mxu0 0
      %570 = vmatprep.subr.bf16.mxu0 0
      %571 = vmatpush1.bf16.msra.mxu0 0
      %572 = vmatprep.subr.bf16.mxu0 0
      %573 = vmatpush1.bf16.msra.mxu0 0
      %574 = vmatprep.subr.bf16.mxu0 0
      %575 = vmatpush1.bf16.msra.mxu0 0
      %576 = vmatprep.subr.bf16.mxu0 0
      %577 = vmatpush1.bf16.msra.mxu0 0
      %578 = vmatprep.subr.bf16.mxu0 0
      %579 = vmatpush1.bf16.msra.mxu0 0
      %580 = vmatprep.mubr.bf16.mxu0 0
      %581 = vmatmul.mubr.bf16.gmra.mrb[0].mxu0 %v546
      %v582 = vpop.f32.mrb[0].mxu0
      %v583 = vadd.f32 0.0, %v582
      %v584 = vpop.f32.mrb[0].mxu0
      %v585 = vpop.f32.mrb[0].mxu0
      %v586 = vpop.f32.mrb[0].mxu0
      %587 = vdwg.mxu0
      %v604 = vunpack.c.l.b16 %v509
      %v605 = vunpack.c.l.b16 %v510
      %v606 = vunpack.c.l.b16 %v511
      %v607 = vunpack.c.l.b16 %v512
      %v608 = vunpack.c.l.b16 %v513
      %v609 = vunpack.c.l.b16 %v514
      %v610 = vunpack.c.l.b16 %v515
      %v611 = vunpack.c.l.b16 %v516
      %v612 = vunpack.c.l.b16 %v517
      %v613 = vunpack.c.l.b16 %v518
      %v614 = vunpack.c.l.b16 %v519
      %v615 = vunpack.c.l.b16 %v520
      %v616 = vunpack.c.l.b16 %v521
      %v617 = vunpack.c.l.b16 %v522
      %v618 = vunpack.c.l.b16 %v523
      %v619 = vunpack.c.l.b16 %v524
      %v620 = vpack.c.b16 %v605, %v604
      %v621 = vpack.c.b16 %v607, %v606
      %v622 = vpack.c.b16 %v609, %v608
      %v623 = vpack.c.b16 %v611, %v610
      %v624 = vpack.c.b16 %v613, %v612
      %v625 = vpack.c.b16 %v615, %v614
      %v626 = vpack.c.b16 %v617, %v616
      %v627 = vpack.c.b16 %v619, %v618
      %636 = vmatprep.subr.bf16.mxu0 0
      %637 = vmatpush1.bf16.msra.mxu0 %v620
      %638 = vmatprep.subr.bf16.mxu0 0
      %639 = vmatpush1.bf16.msra.mxu0 %v621
      %640 = vmatprep.subr.bf16.mxu0 0
      %641 = vmatpush1.bf16.msra.mxu0 %v622
      %642 = vmatprep.subr.bf16.mxu0 0
      %643 = vmatpush1.bf16.msra.mxu0 %v623
      %644 = vmatprep.subr.bf16.mxu0 0
      %645 = vmatpush1.bf16.msra.mxu0 %v624
      %646 = vmatprep.subr.bf16.mxu0 0
      %647 = vmatpush1.bf16.msra.mxu0 %v625
      %648 = vmatprep.subr.bf16.mxu0 0
      %649 = vmatpush1.bf16.msra.mxu0 %v626
      %650 = vmatprep.subr.bf16.mxu0 0
      %651 = vmatpush1.bf16.msra.mxu0 %v627
      %652 = vmatprep.subr.bf16.mxu0 0
      %653 = vmatpush1.bf16.msra.mxu0 0
      %654 = vmatprep.subr.bf16.mxu0 0
      %655 = vmatpush1.bf16.msra.mxu0 0
      %656 = vmatprep.subr.bf16.mxu0 0
      %657 = vmatpush1.bf16.msra.mxu0 0
      %658 = vmatprep.subr.bf16.mxu0 0
      %659 = vmatpush1.bf16.msra.mxu0 0
      %660 = vmatprep.subr.bf16.mxu0 0
      %661 = vmatpush1.bf16.msra.mxu0 0
      %662 = vmatprep.subr.bf16.mxu0 0
      %663 = vmatpush1.bf16.msra.mxu0 0
      %664 = vmatprep.subr.bf16.mxu0 0
      %665 = vmatpush1.bf16.msra.mxu0 0
      %666 = vmatprep.subr.bf16.mxu0 0
      %667 = vmatpush1.bf16.msra.mxu0 0
      %668 = vmatprep.mubr.bf16.mxu0 0
      %669 = vmatmul.mubr.bf16.gmra.mrb[0].mxu0 %v458
      %v670 = vpop.f32.mrb[0].mxu0
      %v671 = vadd.f32 %v583, %v670
      %v672 = vpop.f32.mrb[0].mxu0
      %v673 = vpop.f32.mrb[0].mxu0
      %v674 = vpop.f32.mrb[0].mxu0
      %675 = vdwg.mxu0
      %v676 = vld [vmem:[%s5] sm:$0xf]
      %v677 = vld [vmem:[%s5 + $0x4] sm:$0xf]
      %v678 = vld [vmem:[%s5 + $0x8] sm:$0xf]
      %v679 = vld [vmem:[%s5 + $0xc] sm:$0xf]
      %v684 = vunpack.c.l.b16 %v676
      %v685 = vunpack.c.l.b16 %v677
      %v686 = vunpack.c.l.b16 %v678
      %v687 = vunpack.c.l.b16 %v679
      %v688 = vpack.c.b16 %v685, %v684
      %v689 = vpack.c.b16 %v687, %v686
      %v693 = vsel %vm544, %v508, 0
      %695 = vmatprep.subr.bf16.mxu0 0
      %696 = vmatpush1.bf16.msra.mxu0 %v688
      %697 = vmatprep.subr.bf16.mxu0 0
      %698 = vmatpush1.bf16.msra.mxu0 %v689
      %699 = vmatprep.subr.bf16.mxu0 0
      %700 = vmatpush1.bf16.msra.mxu0 0
      %701 = vmatprep.subr.bf16.mxu0 0
      %702 = vmatpush1.bf16.msra.mxu0 0
      %703 = vmatprep.subr.bf16.mxu0 0
      %704 = vmatpush1.bf16.msra.mxu0 0
      %705 = vmatprep.subr.bf16.mxu0 0
      %706 = vmatpush1.bf16.msra.mxu0 0
      %707 = vmatprep.subr.bf16.mxu0 0
      %708 = vmatpush1.bf16.msra.mxu0 0
      %709 = vmatprep.subr.bf16.mxu0 0
      %710 = vmatpush1.bf16.msra.mxu0 0
      %711 = vmatprep.subr.bf16.mxu0 0
      %712 = vmatpush1.bf16.msra.mxu0 0
      %713 = vmatprep.subr.bf16.mxu0 0
      %714 = vmatpush1.bf16.msra.mxu0 0
      %715 = vmatprep.subr.bf16.mxu0 0
      %716 = vmatpush1.bf16.msra.mxu0 0
      %717 = vmatprep.subr.bf16.mxu0 0
      %718 = vmatpush1.bf16.msra.mxu0 0
      %719 = vmatprep.subr.bf16.mxu0 0
      %720 = vmatpush1.bf16.msra.mxu0 0
      %721 = vmatprep.subr.bf16.mxu0 0
      %722 = vmatpush1.bf16.msra.mxu0 0
      %723 = vmatprep.subr.bf16.mxu0 0
      %724 = vmatpush1.bf16.msra.mxu0 0
      %725 = vmatprep.subr.bf16.mxu0 0
      %726 = vmatpush1.bf16.msra.mxu0 0
      %727 = vmatprep.mubr.bf16.mxu0 0
      %728 = vmatmul.mubr.bf16.gmra.mrb[0].mxu0 %v693
      %v729 = vpop.f32.mrb[0].mxu0
      %v730 = vadd.f32 0.0, %v729
      %v731 = vpop.f32.mrb[0].mxu0
      %v732 = vpop.f32.mrb[0].mxu0
      %v733 = vpop.f32.mrb[0].mxu0
      %734 = vdwg.mxu0
      %v735 = vadd.f32 %v671, %v730
      %v736 = vld [vmem:[%s6] sm:$0x1]
      %v738 = vlaneseq
      %v739 = vshrl.u32 %v738, 7
      %v740 = vsub.s32 0, %v739
      %v741 = vrot.slane %v736, %v740
      %v743 = vadd.f32 %v735, %v741
      %v744 = vmul.f32 %v743, 0.5
      %v745 = vmul.f32 %v743, 0.70710677
      %v746 = verf.f32.pop %v745
      %v747 = vadd.f32 %v746, 1.0
      %v748 = vmul.f32 %v744, %v747
      %v749 = vpack.c.bf16 %v748, %v748
      %v750 = vld [vmem:[%s7] sm:$0xf]
      %v751 = vld [vmem:[%s7 + $0x4] sm:$0xf]
      %v752 = vld [vmem:[%s7 + $0x8] sm:$0xf]
      %v753 = vld [vmem:[%s7 + $0xc] sm:$0xf]
      %v754 = vld [vmem:[%s7 + $0x10] sm:$0xf]
      %v755 = vld [vmem:[%s7 + $0x14] sm:$0xf]
      %v756 = vld [vmem:[%s7 + $0x18] sm:$0xf]
      %v757 = vld [vmem:[%s7 + $0x1c] sm:$0xf]
      %v758 = vld [vmem:[%s7 + $0x20] sm:$0xf]
      %v759 = vld [vmem:[%s7 + $0x24] sm:$0xf]
      %v760 = vld [vmem:[%s7 + $0x28] sm:$0xf]
      %v761 = vld [vmem:[%s7 + $0x2c] sm:$0xf]
      %v762 = vld [vmem:[%s7 + $0x30] sm:$0xf]
      %v763 = vld [vmem:[%s7 + $0x34] sm:$0xf]
      %v764 = vld [vmem:[%s7 + $0x38] sm:$0xf]
      %v765 = vld [vmem:[%s7 + $0x3c] sm:$0xf]
      %v766 = vld [vmem:[%s8] sm:$0x1]
      %v768 = vlaneseq
      %v769 = vshrl.u32 %v768, 7
      %v770 = vsub.s32 0, %v769
      %v771 = vrot.slane %v766, %v770
      %v789 = vunpack.c.l.b16 %v750
      %v790 = vunpack.c.l.b16 %v751
      %v791 = vunpack.c.l.b16 %v752
      %v792 = vunpack.c.l.b16 %v753
      %v793 = vunpack.c.l.b16 %v754
      %v794 = vunpack.c.l.b16 %v755
      %v795 = vunpack.c.l.b16 %v756
      %v796 = vunpack.c.l.b16 %v757
      %v797 = vunpack.c.l.b16 %v758
      %v798 = vunpack.c.l.b16 %v759
      %v799 = vunpack.c.l.b16 %v760
      %v800 = vunpack.c.l.b16 %v761
      %v801 = vunpack.c.l.b16 %v762
      %v802 = vunpack.c.l.b16 %v763
      %v803 = vunpack.c.l.b16 %v764
      %v804 = vunpack.c.l.b16 %v765
      %v805 = vpack.c.b16 %v790, %v789
      %v806 = vpack.c.b16 %v792, %v791
      %v807 = vpack.c.b16 %v794, %v793
      %v808 = vpack.c.b16 %v796, %v795
      %v809 = vpack.c.b16 %v798, %v797
      %v810 = vpack.c.b16 %v800, %v799
      %v811 = vpack.c.b16 %v802, %v801
      %v812 = vpack.c.b16 %v804, %v803
      %821 = vmatprep.subr.bf16.mxu0 0
      %822 = vmatpush1.bf16.msra.mxu0 %v805
      %823 = vmatprep.subr.bf16.mxu0 0
      %824 = vmatpush1.bf16.msra.mxu0 %v806
      %825 = vmatprep.subr.bf16.mxu0 0
      %826 = vmatpush1.bf16.msra.mxu0 %v807
      %827 = vmatprep.subr.bf16.mxu0 0
      %828 = vmatpush1.bf16.msra.mxu0 %v808
      %829 = vmatprep.subr.bf16.mxu0 0
      %830 = vmatpush1.bf16.msra.mxu0 %v809
      %831 = vmatprep.subr.bf16.mxu0 0
      %832 = vmatpush1.bf16.msra.mxu0 %v810
      %833 = vmatprep.subr.bf16.mxu0 0
      %834 = vmatpush1.bf16.msra.mxu0 %v811
      %835 = vmatprep.subr.bf16.mxu0 0
      %836 = vmatpush1.bf16.msra.mxu0 %v812
      %837 = vmatprep.subr.bf16.mxu0 0
      %838 = vmatpush1.bf16.msra.mxu0 0
      %839 = vmatprep.subr.bf16.mxu0 0
      %840 = vmatpush1.bf16.msra.mxu0 0
      %841 = vmatprep.subr.bf16.mxu0 0
      %842 = vmatpush1.bf16.msra.mxu0 0
      %843 = vmatprep.subr.bf16.mxu0 0
      %844 = vmatpush1.bf16.msra.mxu0 0
      %845 = vmatprep.subr.bf16.mxu0 0
      %846 = vmatpush1.bf16.msra.mxu0 0
      %847 = vmatprep.subr.bf16.mxu0 0
      %848 = vmatpush1.bf16.msra.mxu0 0
      %849 = vmatprep.subr.bf16.mxu0 0
      %850 = vmatpush1.bf16.msra.mxu0 0
      %851 = vmatprep.subr.bf16.mxu0 0
      %852 = vmatpush1.bf16.msra.mxu0 0
      %853 = vmatprep.mubr.bf16.mxu0 0
      %854 = vmatmul.mubr.bf16.gmra.mrb[0].mxu0 %v749
      %v855 = vpop.f32.mrb[0].mxu0
      %v856 = vadd.f32 %v771, %v855
      %v857 = vpop.f32.mrb[0].mxu0
      %v858 = vpop.f32.mrb[0].mxu0
      %v859 = vpop.f32.mrb[0].mxu0
      %860 = vdwg.mxu0
      %861 = vst [vmem:[%s456] sm:$0xff] %v856
      %p862 = scmp.lt.s32.totalorder %s24, 1
      %s863 = scalar_select %p862, %s24, 1
      %p864 = scmp.lt.s32.totalorder %s25, 0
      %s865 = scalar_select %p864, %s25, 0
      %s866 = sadd.s32 %s865, %s863
      %s867 = smul.addr %s866, 8
      %s868 = scalar_lea.vmem %s9, %s867
      // Predicated region
      $region57: #{sparse_kernel1d_forward.1} parent=55 // pred_check
        %p869 = pneg %p274
      $region58: #{sparse_kernel1d_forward.1} parent=55 // pred_check_branch
        %871 = sbr.rel (%p869) target = $region60
      $region59: #{sparse_kernel1d_forward.1} parent=55 // pred_region
        _
      $region60: #{sparse_kernel1d_forward.1} parent=55 // pred_fallthru
        _
    $region56: #{sparse_kernel1d_forward.1} parent=5 // pred_fallthru
      _
    %p872 = scmp.le.s32.totalorder 2, %s15
    // Predicated region
    $region61: #{sparse_kernel1d_forward.1} parent=5 // pred_check
      %p873 = pneg %p872
    $region62: #{sparse_kernel1d_forward.1} parent=5 // pred_check_branch
      %875 = sbr.rel (%p873) target = $region64
    $region63: #{sparse_kernel1d_forward.1} parent=5 // pred_region
      %s876 = ssub.s32 %s15, 2
      // Predicated region
      $region65: #{sparse_kernel1d_forward.1} parent=63 // pred_check
        %p877 = pneg %p280
      $region66: #{sparse_kernel1d_forward.1} parent=63 // pred_check_branch
        %879 = sbr.rel (%p877) target = $region68
      $region67: #{sparse_kernel1d_forward.1} parent=63 // pred_region
        %p880 = scmp.lt.s32.totalorder %s26, 1
        %s881 = scalar_select %p880, %s26, 1
        %p882 = scmp.lt.s32.totalorder %s27, 0
        %s883 = scalar_select %p882, %s27, 0
        %s884 = sadd.s32 %s883, %s881
        %s885 = smul.addr %s884, 8
        %s886 = scalar_lea.vmem %s9, %s885
      $region68: #{sparse_kernel1d_forward.1} parent=63 // pred_fallthru
        _
    $region64: #{sparse_kernel1d_forward.1} parent=5 // pred_fallthru
      _
  $region6: #{sparse_kernel1d_forward.1} parent=0 // loop_footer
    %s19 = sadd.s32 1, %s15
  $region7: #{sparse_kernel1d_forward.1} parent=0 // loop_footer_branch
    %14 = sbr.rel target = $region3
  $region8: #{sparse_kernel1d_forward.1} parent=0 // loop_exit
    _

</llo_original>
